<compile_context>
chip_gen: v7x
topology: tpu7x:2x2x1
jax: 0.10.0
libtpu: 0.0.40
codegen_flags: <defaults>
</compile_context>

<pallas_src>
import functools

import jax
import jax.numpy as jnp
import numpy as np
from jax.experimental import pallas as pl
from jax.experimental.pallas import tpu as pltpu


# ----------------------------------------------------------------------------
# Parameter construction (mirrors init_kernels(..., invers=True), deterministic)
# ----------------------------------------------------------------------------
def _hamming_periodic(n):
    k = np.arange(n)
    return 0.54 - 0.46 * np.cos(2.0 * np.pi * k / n)


def init_kernels_np(win_len, fft_len, win_type="hamming", invers=True):
    if win_type is None or win_type == "None":
        window = np.ones(win_len)
    elif win_type == "hamming":
        window = _hamming_periodic(win_len)  # scipy get_window('hamming', n, fftbins=True)
    else:
        raise ValueError(f"unsupported win_type {win_type}")
    N = fft_len
    fourier_basis = np.fft.rfft(np.eye(N))[:win_len]                  # [win_len, N//2+1]
    real_kernel = np.real(fourier_basis)
    imag_kernel = np.imag(fourier_basis)
    kernel = np.concatenate([real_kernel, imag_kernel], 1).T          # [N+2, win_len]
    if invers:
        kernel = np.linalg.pinv(kernel).T                             # [N+2, win_len]
    kernel = kernel * window
    return kernel.astype(np.float32), window.astype(np.float32)       # weight[:,0,:], window


def _round_up(a, b):
    return ((a + b - 1) // b) * b


def _cdiv(a, b):
    return -(-a // b)


# ----------------------------------------------------------------------------
# Pallas kernel: per (batch, time-tile) synthesis matmul + vectorized overlap-add
# + in-kernel window-energy normalization.
# ----------------------------------------------------------------------------
def _istft_ola_kernel(x_ref, w_ref, wsq_ref, out_ref, fr_ref, acc_ref, carry_ref,
                      *, stride, s128, k, t_tile, n_frames, eps):
    # x_ref:     (1, Tt, C)       f32 input frames (cast to w dtype just before the MXU)
    # w_ref:     (C, Wp)          synthesis basis in lane-aligned slab layout, Wp = k*s128
    # wsq_ref:   (k, s128)        window^2 slabs (resident, tiny)
    # out_ref:   (1, Tt, stride)  output tile (frame-row layout)
    # fr_ref:    (Tt, Wp)         f32 scratch: per-frame synthesis output
    # acc_ref:   (Tt+k-1, s128)   f32 scratch: local overlap-add accumulator
    # carry_ref: (max(k-1,1), s128) f32 scratch: overlap tail carried across time tiles
    #
    # NOTE: correctness requires the time grid axis to be the innermost, sequential
    # ("arbitrary") axis; the carry is intentionally ignored at t == 0.
    t = pl.program_id(1)
    Tt = t_tile

    # (Tt, C) @ (C, Wp) on the MXU, f32 accumulate, streamed to VMEM scratch.
    fr_ref[...] = jnp.dot(x_ref[0].astype(w_ref.dtype), w_ref[...],
                          preferred_element_type=jnp.float32)

    # Vectorized overlap-add: k lane-aligned slabs of (Tt, s128) at frame-row offsets 0..k-1.
    acc_ref[0:Tt, :] = fr_ref[:, 0:s128]                   # slab 0: plain write, no zero pass
    if k > 1:
        acc_ref[Tt:, :] = jnp.zeros((k - 1, s128), jnp.float32)     # tiny tail init only
        for j in range(1, k):                              # k = ceil(W/stride): small & static
            acc_ref[j:j + Tt, :] = (acc_ref[j:j + Tt, :]
                                    + fr_ref[:, j * s128:(j + 1) * s128])

        # Add the overlap tail spilled by the previous time tile of this batch item.
        @pl.when(t > 0)
        def _():
            acc_ref[0:k - 1, :] = acc_ref[0:k - 1, :] + carry_ref[...]

        # Save this tile's spill for the next time tile (ignored at the next t == 0).
        carry_ref[...] = acc_ref[Tt:, :]

    # Window-energy normalization, computed in-kernel (no per-tile HBM stream):
    # coff[r, s] = sum_j window^2[j*stride + s] * [0 <= r - j < n_frames].
    rows = t * Tt + jax.lax.broadcasted_iota(jnp.int32, (Tt, s128), 0)
    coff = jnp.zeros((Tt, s128), jnp.float32)
    for j in range(k):
        valid = jnp.logical_and(rows >= j, rows < n_frames + j).astype(jnp.float32)
        coff = coff + valid * wsq_ref[j:j + 1, :]
    inv = pl.reciprocal(coff + eps, approx=True)           # EUP slot, essentially free
    # Padded frame-rows have coff == 0 and acc == 0; mask them explicitly so future changes
    # cannot blow up through the ~1e8 reciprocal there.
    res = jnp.where(coff > 0.0, acc_ref[0:Tt, :] * inv, 0.0)
    out_ref[0] = res[:, 0:stride].astype(out_ref.dtype)


def conv_istft_pallas(x_btc, weight_cw, wsq_slabs, *, stride, s128, k, t_tile, n_frames,
                      out_dtype=jnp.float32, eps=1e-8):
    """x_btc: [B, T_work, C] f32; weight_cw: [C, k*s128]; wsq_slabs: [k, s128] f32."""
    B, T_work, C = x_btc.shape
    Wp = weight_cw.shape[1]
    nT = T_work // t_tile

    kernel = functools.partial(_istft_ola_kernel, stride=stride, s128=s128, k=k,
                               t_tile=t_tile, n_frames=n_frames, eps=eps)

    return pl.pallas_call(
        kernel,
        out_shape=jax.ShapeDtypeStruct((B, T_work, stride), out_dtype),
        grid_spec=pltpu.PrefetchScalarGridSpec(
            num_scalar_prefetch=0,
            grid=(B, nT),
            in_specs=[
                pl.BlockSpec((1, t_tile, C), lambda b, t: (b, t, 0)),   # one time tile (f32)
                pl.BlockSpec((C, Wp), lambda b, t: (0, 0)),             # weight, resident
                pl.BlockSpec((k, s128), lambda b, t: (0, 0)),           # window^2, resident
            ],
            out_specs=pl.BlockSpec((1, t_tile, stride), lambda b, t: (b, t, 0)),
            scratch_shapes=[
                pltpu.VMEM((t_tile, Wp), jnp.float32),                  # frame outputs
                pltpu.VMEM((t_tile + k - 1, s128), jnp.float32),        # local OLA accumulator
                pltpu.VMEM((max(k - 1, 1), s128), jnp.float32),         # overlap-tail carry
            ],
        ),
        compiler_params=pltpu.CompilerParams(
            # batch parallel (megacore); time MUST stay sequential (cross-tile carry).
            dimension_semantics=("parallel", "arbitrary"),
            # Large time tiles need more than the default scoped VMEM; 64 MiB is within
            # physical VMEM on v5e/v6e/v7x and leaves headroom at Tt=2048.
            vmem_limit_bytes=64 * 1024 * 1024,
        ),
    )(x_btc, weight_cw, wsq_slabs)


def conv_istft_forward(inputs_bct, weight_cw, window_w, *, stride, win_len,
                       length=None, time_tile=2048, compute_dtype=jnp.bfloat16,
                       out_dtype=jnp.float32):
    """Full ConviSTFT.forward (phase=None path). inputs_bct: [B, fft_len+2, T]."""
    B, C, T = inputs_bct.shape
    W = win_len
    k = _cdiv(W, stride)                    # slabs per frame
    S128 = _round_up(stride, 128)           # lane-aligned slab width
    Wp = k * S128

    # Frames to run through the grid; the `length` path may read past sample T*stride,
    # so flush the (k-1)-frame overlap tail in that case.
    T_needed = T + ((k - 1) if length else 0)
    nT = max(1, _cdiv(T_needed, max(int(time_tile), 1)))
    Tt = _round_up(_cdiv(T_needed, nT), 16)                # multiple of 16 (bf16 sublanes)
    Tt = max(Tt, 16, _round_up(k - 1, 16))                 # carry must fit in one tile
    T_work = nT * Tt

    # x: NCT -> NTC, pad time only.  Stays f32 with the true C as last dim; the bf16 cast
    # happens in-kernel right before the dot (no extra HBM materialization, no K padding).
    x = jnp.transpose(inputs_bct, (0, 2, 1)).astype(jnp.float32)
    x = jnp.pad(x, ((0, 0), (0, T_work - T), (0, 0)))

    # Weight in lane-aligned slab layout: slab j occupies columns [j*S128, j*S128+stride).
    w = weight_cw.astype(jnp.float32)
    w = jnp.pad(w, ((0, 0), (0, k * stride - W))).reshape(C, k, stride)
    w = jnp.pad(w, ((0, 0), (0, 0), (0, S128 - stride))).reshape(C, Wp)
    w = w.astype(compute_dtype)

    # window^2 in the same slab layout (tiny resident table; coff/reciprocal are in-kernel).
    win = window_w.astype(jnp.float32).reshape(-1)
    wsq = jnp.pad(win * win, (0, k * stride - W)).reshape(k, stride)
    wsq = jnp.pad(wsq, ((0, 0), (0, S128 - stride)))

    out = conv_istft_pallas(x, w, wsq, stride=stride, s128=S128, k=k, t_tile=Tt,
                            n_frames=T, out_dtype=out_dtype)
    out_flat = out.reshape(B, T_work * stride)             # frame-rows -> samples (free)

    cut = W - stride
    if length:
        end = cut + min(int(length), T * stride)
    else:
        end = T * stride
    # Plain slice; fuses into the consumer under jit.  Callers that can consume the
    # untrimmed frame-row layout should take `out` directly to avoid any copy.
    return out_flat[:, cut:end][:, None, :]                # [B, 1, L_trimmed]
    # TODO(synk): the `phase is not None` branch (mag/phase -> real/imag concat) is trivial
    # elementwise glue on the inputs and is not implemented here (default complex-spec path).


# ----------------------------------------------------------------------------
# NumPy reference (direct conv_transpose1d semantics) for self-check.
# ----------------------------------------------------------------------------
def _ref_forward(x_bct, weight_cw, window_w, stride, win_len):
    B, C, T = x_bct.shape
    W = win_len
    L_out = (T - 1) * stride + W
    out = np.zeros((B, L_out), dtype=np.float64)
    coff = np.zeros((L_out,), dtype=np.float64)
    for t in range(T):
        out[:, t * stride:t * stride + W] += (
            x_bct[:, :, t].astype(np.float64) @ weight_cw.astype(np.float64))
        coff[t * stride:t * stride + W] += window_w.astype(np.float64) ** 2
    out = out / (coff[None, :] + 1e-8)
    cut = W - stride
    return out[:, None, cut:-cut]


if __name__ == "__main__":
    # Small, module-consistent shapes; time_tile=16 < T exercises the cross-tile carry
    # (3 time tiles) and stride=16 < 128 exercises the lane-aligned slab padding.
    win_len, win_inc, fft_len = 32, 16, 32
    B, T = 2, 48
    C = fft_len + 2                                                   # 34

    weight_np, window_np = init_kernels_np(win_len, fft_len, "hamming", invers=True)

    key = jax.random.PRNGKey(0)
    inputs = jax.random.normal(key, (B, C, T), dtype=jnp.float32)     # [B, N+2, T] complex spec

    out = conv_istft_forward(inputs, jnp.asarray(weight_np), jnp.asarray(window_np),
                             stride=win_inc, win_len=win_len, time_tile=16)
    out = jax.block_until_ready(out)

    ref = _ref_forward(np.asarray(inputs), weight_np, window_np, win_inc, win_len)
    assert out.shape == ref.shape, (out.shape, ref.shape)
    # bf16 MXU inputs (f32 accumulate) + approx reciprocal -> loosened tolerance.
    np.testing.assert_allclose(np.asarray(out), ref, rtol=5e-2, atol=2e-2)

    print("KERNEL_OK")
</pallas_src>

<mosaic_0001>
module attributes {stable_mosaic.version = 11 : i64} {
  func.func @_istft_ola_kernel(%arg0: i32, %arg1: i32, %arg2: memref<1x16x34xf32, #tpu.memory_space<vmem>>, %arg3: memref<34x256xbf16, #tpu.memory_space<vmem>>, %arg4: memref<2x128xf32, #tpu.memory_space<vmem>>, %arg5: memref<1x16x16xf32, #tpu.memory_space<vmem>>, %arg6: memref<16x256xf32, #tpu.memory_space<vmem>>, %arg7: memref<17x128xf32, #tpu.memory_space<vmem>>, %arg8: memref<1x128xf32, #tpu.memory_space<vmem>>) attributes {dimension_semantics = [#tpu.dimension_semantics<parallel>, #tpu.dimension_semantics<arbitrary>], iteration_bounds = array<i64: 2, 3>, scalar_prefetch = 0 : i64, scratch_operands = 3 : i64, tpu.core_type = #tpu.core_type<tc>, window_params = [{transform_indices = @transform_0, window_bounds = array<i64: 1, 16, 34>}, {pipeline_mode = #tpu.pipeline_mode<synchronous>, transform_indices = @transform_1, window_bounds = array<i64: 34, 256>}, {pipeline_mode = #tpu.pipeline_mode<synchronous>, transform_indices = @transform_2, window_bounds = array<i64: 2, 128>}, {transform_indices = @transform_3, window_bounds = array<i64: 1, 16, 16>}]} {
    %c0 = arith.constant 0 : index
    %c0_0 = arith.constant 0 : index
    %c0_1 = arith.constant 0 : index
    %0 = vector.load %arg2[%c0, %c0_0, %c0_1] : memref<1x16x34xf32, #tpu.memory_space<vmem>>, vector<1x16x34xf32>
    %1 = vector.shape_cast %0 : vector<1x16x34xf32> to vector<16x34xf32>
    %2 = arith.truncf %1 : vector<16x34xf32> to vector<16x34xbf16>
    %c0_2 = arith.constant 0 : index
    %c0_3 = arith.constant 0 : index
    %3 = vector.load %arg3[%c0_2, %c0_3] : memref<34x256xbf16, #tpu.memory_space<vmem>>, vector<34x256xbf16>
    %cst = arith.constant dense<0.000000e+00> : vector<16x256xf32>
    %4 = tpu.matmul %2, %3, %cst {dimension_numbers = #tpu.dot_dimension_numbers<[1], [0], [0], [1], [0, 0, 1, 1], [], []>} : vector<16x34xbf16>, vector<34x256xbf16>, vector<16x256xf32> -> vector<16x256xf32>
    %c0_4 = arith.constant 0 : index
    %c0_5 = arith.constant 0 : index
    %5 = vector.load %arg6[%c0_4, %c0_5] : memref<16x256xf32, #tpu.memory_space<vmem>>, vector<16x256xf32>
    tpu.vector_store %arg6[%c0_4, %c0_5], %4 {strides = array<i32>} : memref<16x256xf32, #tpu.memory_space<vmem>>, vector<16x256xf32>,
    %c0_6 = arith.constant 0 : index
    %c0_7 = arith.constant 0 : index
    %6 = vector.load %arg6[%c0_6, %c0_7] : memref<16x256xf32, #tpu.memory_space<vmem>>, vector<16x128xf32>
    %c0_8 = arith.constant 0 : index
    %c0_9 = arith.constant 0 : index
    %7 = vector.load %arg7[%c0_8, %c0_9] : memref<17x128xf32, #tpu.memory_space<vmem>>, vector<16x128xf32>
    tpu.vector_store %arg7[%c0_8, %c0_9], %6 {strides = array<i32>} : memref<17x128xf32, #tpu.memory_space<vmem>>, vector<16x128xf32>,
    %cst_10 = arith.constant 0.000000e+00 : f32
    %8 = vector.broadcast %cst_10 : f32 to vector<1x128xf32>
    %c16 = arith.constant 16 : index
    %c0_11 = arith.constant 0 : index
    %9 = vector.load %arg7[%c16, %c0_11] : memref<17x128xf32, #tpu.memory_space<vmem>>, vector<1x128xf32>
    tpu.vector_store %arg7[%c16, %c0_11], %8 {strides = array<i32>} : memref<17x128xf32, #tpu.memory_space<vmem>>, vector<1x128xf32>,
    %c1 = arith.constant 1 : index
    %c0_12 = arith.constant 0 : index
    %10 = vector.load %arg7[%c1, %c0_12] : memref<17x128xf32, #tpu.memory_space<vmem>>, vector<16x128xf32>
    %c0_13 = arith.constant 0 : index
    %c128 = arith.constant 128 : index
    %11 = vector.load %arg6[%c0_13, %c128] : memref<16x256xf32, #tpu.memory_space<vmem>>, vector<16x128xf32>
    %12 = arith.addf %10, %11 : vector<16x128xf32>
    %c1_14 = arith.constant 1 : index
    %c0_15 = arith.constant 0 : index
    %13 = vector.load %arg7[%c1_14, %c0_15] : memref<17x128xf32, #tpu.memory_space<vmem>>, vector<16x128xf32>
    tpu.vector_store %arg7[%c1_14, %c0_15], %12 {strides = array<i32>} : memref<17x128xf32, #tpu.memory_space<vmem>>, vector<16x128xf32>,
    %c0_i32 = arith.constant 0 : i32
    %14 = arith.cmpi sgt, %arg1, %c0_i32 : i32
    %15 = arith.extui %14 : i1 to i32
    %c0_i32_16 = arith.constant 0 : i32
    %16 = arith.cmpi ne, %15, %c0_i32_16 : i32
    scf.if %16 {
      %c0_35 = arith.constant 0 : index
      %c0_36 = arith.constant 0 : index
      %59 = vector.load %arg7[%c0_35, %c0_36] : memref<17x128xf32, #tpu.memory_space<vmem>>, vector<1x128xf32>
      %c0_37 = arith.constant 0 : index
      %c0_38 = arith.constant 0 : index
      %60 = vector.load %arg8[%c0_37, %c0_38] : memref<1x128xf32, #tpu.memory_space<vmem>>, vector<1x128xf32>
      %61 = arith.addf %59, %60 : vector<1x128xf32>
      %c0_39 = arith.constant 0 : index
      %c0_40 = arith.constant 0 : index
      %62 = vector.load %arg7[%c0_39, %c0_40] : memref<17x128xf32, #tpu.memory_space<vmem>>, vector<1x128xf32>
      tpu.vector_store %arg7[%c0_39, %c0_40], %61 {strides = array<i32>} : memref<17x128xf32, #tpu.memory_space<vmem>>, vector<1x128xf32>,
    } else {
    }
    %c16_17 = arith.constant 16 : index
    %c0_18 = arith.constant 0 : index
    %17 = vector.load %arg7[%c16_17, %c0_18] : memref<17x128xf32, #tpu.memory_space<vmem>>, vector<1x128xf32>
    %c0_19 = arith.constant 0 : index
    %c0_20 = arith.constant 0 : index
    %18 = vector.load %arg8[%c0_19, %c0_20] : memref<1x128xf32, #tpu.memory_space<vmem>>, vector<1x128xf32>
    tpu.vector_store %arg8[%c0_19, %c0_20], %17 {strides = array<i32>} : memref<1x128xf32, #tpu.memory_space<vmem>>, vector<1x128xf32>,
    %c16_i32 = arith.constant 16 : i32
    %19 = arith.muli %arg1, %c16_i32 : i32
    %20 = tpu.iota {dimensions = array<i32: 0>} : vector<16x128xi32>
    %21 = vector.broadcast %19 : i32 to vector<16x128xi32>
    %22 = arith.addi %21, %20 : vector<16x128xi32>
    %cst_21 = arith.constant 0.000000e+00 : f32
    %23 = vector.broadcast %cst_21 : f32 to vector<16x128xf32>
    %c0_i32_22 = arith.constant 0 : i32
    %24 = vector.broadcast %c0_i32_22 : i32 to vector<16x128xi32>
    %25 = arith.cmpi sge, %22, %24 : vector<16x128xi32>
    %c48_i32 = arith.constant 48 : i32
    %26 = vector.broadcast %c48_i32 : i32 to vector<16x128xi32>
    %27 = arith.cmpi slt, %22, %26 : vector<16x128xi32>
    %28 = arith.andi %25, %27 : vector<16x128xi1>
    %29 = arith.extui %28 : vector<16x128xi1> to vector<16x128xi32>
    %30 = arith.sitofp %29 : vector<16x128xi32> to vector<16x128xf32>
    %c0_23 = arith.constant 0 : index
    %c0_24 = arith.constant 0 : index
    %31 = vector.load %arg4[%c0_23, %c0_24] : memref<2x128xf32, #tpu.memory_space<vmem>>, vector<1x128xf32>
    %32 = vector.broadcast %31 : vector<1x128xf32> to vector<16x128xf32>
    %33 = arith.mulf %30, %32 : vector<16x128xf32>
    %34 = arith.addf %23, %33 : vector<16x128xf32>
    %c1_i32 = arith.constant 1 : i32
    %35 = vector.broadcast %c1_i32 : i32 to vector<16x128xi32>
    %36 = arith.cmpi sge, %22, %35 : vector<16x128xi32>
    %c49_i32 = arith.constant 49 : i32
    %37 = vector.broadcast %c49_i32 : i32 to vector<16x128xi32>
    %38 = arith.cmpi slt, %22, %37 : vector<16x128xi32>
    %39 = arith.andi %36, %38 : vector<16x128xi1>
    %40 = arith.extui %39 : vector<16x128xi1> to vector<16x128xi32>
    %41 = arith.sitofp %40 : vector<16x128xi32> to vector<16x128xf32>
    %c1_25 = arith.constant 1 : index
    %c0_26 = arith.constant 0 : index
    %42 = vector.load %arg4[%c1_25, %c0_26] : memref<2x128xf32, #tpu.memory_space<vmem>>, vector<1x128xf32>
    %43 = vector.broadcast %42 : vector<1x128xf32> to vector<16x128xf32>
    %44 = arith.mulf %41, %43 : vector<16x128xf32>
    %45 = arith.addf %34, %44 : vector<16x128xf32>
    %cst_27 = arith.constant 9.99999993E-9 : f32
    %46 = vector.broadcast %cst_27 : f32 to vector<16x128xf32>
    %47 = arith.addf %45, %46 : vector<16x128xf32>
    %48 = tpu.reciprocal %47 {approx = true} : vector<16x128xf32> -> vector<16x128xf32>
    %cst_28 = arith.constant 0.000000e+00 : f32
    %49 = vector.broadcast %cst_28 : f32 to vector<16x128xf32>
    %50 = arith.cmpf ogt, %45, %49 : vector<16x128xf32>
    %c0_29 = arith.constant 0 : index
    %c0_30 = arith.constant 0 : index
    %51 = vector.load %arg7[%c0_29, %c0_30] : memref<17x128xf32, #tpu.memory_space<vmem>>, vector<16x128xf32>
    %52 = arith.mulf %51, %48 : vector<16x128xf32>
    %cst_31 = arith.constant 0.000000e+00 : f32
    %53 = vector.broadcast %cst_31 : f32 to vector<16x128xf32>
    %54 = arith.select %50, %52, %53 : vector<16x128xi1>, vector<16x128xf32>
    %55 = vector.extract_strided_slice %54 {offsets = [0, 0], sizes = [16, 16], strides = [1, 1]} : vector<16x128xf32> to vector<16x16xf32>
    %c0_32 = arith.constant 0 : index
    %c0_33 = arith.constant 0 : index
    %c0_34 = arith.constant 0 : index
    %56 = vector.load %arg5[%c0_32, %c0_33, %c0_34] : memref<1x16x16xf32, #tpu.memory_space<vmem>>, vector<1x16x16xf32>
    %57 = vector.shape_cast %56 : vector<1x16x16xf32> to vector<16x16xf32>
    %58 = vector.shape_cast %55 : vector<16x16xf32> to vector<1x16x16xf32>
    tpu.vector_store %arg5[%c0_32, %c0_33, %c0_34], %58 {strides = array<i32>} : memref<1x16x16xf32, #tpu.memory_space<vmem>>, vector<1x16x16xf32>,
    return
  }
  func.func @transform_0(%arg0: i32, %arg1: i32) -> (i32, i32, i32) {
    %c0_i32 = arith.constant 0 : i32
    %c0_i32_0 = arith.constant 0 : i32
    return %arg0, %arg1, %c0_i32 : i32, i32, i32
  }
  func.func @transform_1(%arg0: i32, %arg1: i32) -> (i32, i32) {
    %c0_i32 = arith.constant 0 : i32
    %c0_i32_0 = arith.constant 0 : i32
    %c0_i32_1 = arith.constant 0 : i32
    return %c0_i32, %c0_i32_0 : i32, i32
  }
  func.func @transform_2(%arg0: i32, %arg1: i32) -> (i32, i32) {
    %c0_i32 = arith.constant 0 : i32
    %c0_i32_0 = arith.constant 0 : i32
    %c0_i32_1 = arith.constant 0 : i32
    return %c0_i32, %c0_i32_0 : i32, i32
  }
  func.func @transform_3(%arg0: i32, %arg1: i32) -> (i32, i32, i32) {
    %c0_i32 = arith.constant 0 : i32
    %c0_i32_0 = arith.constant 0 : i32
    return %arg0, %arg1, %c0_i32 : i32, i32, i32
  }
}

</mosaic_0001>

<llo_original>
// kernel: tpu_custom_call.1
$region0: #{tpu_custom_call.1}
  #allocation0 [shape = 'u32[]', space=smem, size = 0x4, offset = 0x4, fixed_abs, tag = 'smem constant byte address 0x4 - core index']
  #allocation1 [shape = 'u32[144,128]{1,0:T(1,128)}', space=vmem, size = 0x12000, scoped, tag = 'internal scratch']
  #allocation2 [shape = 'f32[16,256]{1,0:T(8,128)}', space=vmem, size = 0x4000, scoped, tag = 'scratch operand']
  #allocation3 [shape = 'f32[17,128]{1,0:T(8,128)}', space=vmem, size = 0x3000, scoped, tag = 'scratch operand']
  #allocation4 [shape = 'f32[1,128]{1,0:T(1,128)}', space=vmem, size = 0x200, scoped, tag = 'scratch operand']
  %s0 = inlined_call_operand.hbm [shape: f32[2,48,34], index: 0, kind: input, shape index: {}]
  %s1 = inlined_call_operand.hbm [shape: bf16[34,256], index: 1, kind: input, shape index: {}]
  %s2 = inlined_call_operand.hbm [shape: f32[2,128], index: 2, kind: input, shape index: {}]
  %s3 = inlined_call_operand.hbm [shape: f32[2,48,16], index: 3, kind: output, shape index: {}]
  %s4 = sld [smem:[#allocation0]]
  $region61: #{tpu_custom_call.1} parent=0
    _
  %s6 = ssub.s32 1, %s4
  %s7 = scalar_select 0, %s6, %s4
  $region1: #{tpu_custom_call.1} parent=0
    #allocation5 [shape = 'u8[16384]{0}', space=vmem, size = 0x4000, scoped, tag = 'input window, operand 0']
    #allocation6 [shape = 's32[2]{0}', space=sflag, size = 0x8, scoped, tag = 'scoped memory for tpu_custom_call.1']
    #allocation7 [shape = 's32[2]{0}', space=sflag, size = 0x8, scoped, tag = 'scoped memory for tpu_custom_call.1']
    #allocation8 [shape = 'u8[20480]{0}', space=vmem, size = 0x5000, scoped, tag = 'input window, operand 1, single buffered']
    #allocation9 [shape = 's32[1]{0}', space=sflag, size = 0x4, scoped, tag = 'scoped memory for tpu_custom_call.1']
    #allocation10 [shape = 'u8[1024]{0}', space=vmem, size = 0x400, scoped, tag = 'input window, operand 2, single buffered']
    #allocation11 [shape = 'u8[16384]{0}', space=vmem, size = 0x4000, scoped, tag = 'output window, operand 0']
    %8 = vsyncpa [#allocation6], 0
    %s9 = scalar_lea.sflag [#allocation6], 1
    %10 = vsyncpa %s9, 0
    %11 = vsyncpa [#allocation9], 0
    %12 = vsyncpa [#allocation7], 0
    %s13 = scalar_lea.sflag [#allocation7], 1
    %14 = vsyncpa %s13, 0
    loop: start=0, step=1, limit=8
    $region2: #{tpu_custom_call.1} parent=1 // loop_pre_header
      _
    $region3: #{tpu_custom_call.1} parent=1 // loop_header
      %s16 = sphi 0, %s20
      %p17 = scmp.ge.s32.totalorder %s16, 8
      %s23 = sphi 0, %s35
      %s24 = sphi 0, %s31
      %s25 = sphi 0, %s23
      %s26 = sphi 0, %s24
      %s27 = sphi 0, %s25
      %s28 = sphi 0, %s26
      %s40 = sphi 0, %s42
      %s43 = sphi 0, %s40
      %s44 = sphi 0, %s43
      %s60 = sphi 0, %s44
      %s64 = sphi 0, %s64
      %s66 = sphi 0, %s64
      %s67 = sphi 0, %s66
      %s81 = sphi 0, %s67
      %s85 = sphi 0, %s85
      %s87 = sphi 0, %s85
      %s88 = sphi 0, %s87
      %s102 = sphi 0, %s88
      %s110 = sphi 0, %s112
      %s113 = sphi 0, %s110
      %s114 = sphi 0, %s113
      %s130 = sphi 0, %s114
    $region4: #{tpu_custom_call.1} parent=1 // loop_header_branch
      %19 = sbr.rel (%p17) target = $region8
    $region5: #{tpu_custom_call.1} parent=1 // loop_body
      %s21 = ssub.s32 %s16, 1
      %s22 = ssub.s32 %s16, 2
      %s29 = sadd.s32 1, %s24
      %p30 = scmp.ge.s32.totalorder %s29, 3
      %s31 = scalar_select %p30, 0, %s29
      %s32 = sadd.s32 1, %s23
      %s33 = scalar_select %p30, %s32, %s23
      %p34 = scmp.ge.s32.totalorder %s33, 2
      %s35 = scalar_select %p34, 0, %s33
      %s36 = ssub.s32 %s23, %s35
      %s37 = ssub.s32 %s24, %s31
      %s38 = sor.u32 %s36, %s37
      %p39 = scmp.eq.s32.totalorder %s38, 0
      %s41 = sadd.s32 %s40, 1
      %s42 = scalar_select %p39, %s40, %s41
      %p45 = pneg %p39
      %p46 = scmp.eq.s32.totalorder %s16, 5
      %p47 = por %p45, %p46
      %p48 = scmp.ne.s32.totalorder %s40, %s43
      %p49 = scmp.eq.s32.totalorder %s16, 0
      %p50 = por %p48, %p49
      %p51 = scmp.ne.s32.totalorder %s40, %s43
      %p52 = scmp.eq.s32.totalorder %s21, 5
      %p53 = por %p51, %p52
      %p54 = scmp.ne.s32.totalorder %s43, %s44
      %p55 = scmp.eq.s32.totalorder %s21, 0
      %p56 = por %p54, %p55
      %p57 = scmp.ne.s32.totalorder %s43, %s44
      %p58 = scmp.eq.s32.totalorder %s22, 5
      %p59 = por %p57, %p58
      %p61 = scmp.ne.s32.totalorder %s44, %s60
      %p62 = scmp.eq.s32.totalorder %s22, 0
      %p63 = por %p61, %p62
      %s65 = sadd.s32 %s64, 1
      %p68 = scmp.eq.s32.totalorder %s16, 5
      %p69 = scmp.ne.s32.totalorder %s64, %s66
      %p70 = scmp.eq.s32.totalorder %s16, 0
      %p71 = por %p69, %p70
      %p72 = scmp.ne.s32.totalorder %s64, %s66
      %p73 = scmp.eq.s32.totalorder %s21, 5
      %p74 = por %p72, %p73
      %p75 = scmp.ne.s32.totalorder %s66, %s67
      %p76 = scmp.eq.s32.totalorder %s21, 0
      %p77 = por %p75, %p76
      %p78 = scmp.ne.s32.totalorder %s66, %s67
      %p79 = scmp.eq.s32.totalorder %s22, 5
      %p80 = por %p78, %p79
      %p82 = scmp.ne.s32.totalorder %s67, %s81
      %p83 = scmp.eq.s32.totalorder %s22, 0
      %p84 = por %p82, %p83
      %s86 = sadd.s32 %s85, 1
      %p89 = scmp.eq.s32.totalorder %s16, 5
      %p90 = scmp.ne.s32.totalorder %s85, %s87
      %p91 = scmp.eq.s32.totalorder %s16, 0
      %p92 = por %p90, %p91
      %p93 = scmp.ne.s32.totalorder %s85, %s87
      %p94 = scmp.eq.s32.totalorder %s21, 5
      %p95 = por %p93, %p94
      %p96 = scmp.ne.s32.totalorder %s87, %s88
      %p97 = scmp.eq.s32.totalorder %s21, 0
      %p98 = por %p96, %p97
      %p99 = scmp.ne.s32.totalorder %s87, %s88
      %p100 = scmp.eq.s32.totalorder %s22, 5
      %p101 = por %p99, %p100
      %p103 = scmp.ne.s32.totalorder %s88, %s102
      %p104 = scmp.eq.s32.totalorder %s22, 0
      %p105 = por %p103, %p104
      %s106 = ssub.s32 %s23, %s35
      %s107 = ssub.s32 %s24, %s31
      %s108 = sor.u32 %s106, %s107
      %p109 = scmp.eq.s32.totalorder %s108, 0
      %s111 = sadd.s32 %s110, 1
      %s112 = scalar_select %p109, %s110, %s111
      %p115 = pneg %p109
      %p116 = scmp.eq.s32.totalorder %s16, 5
      %p117 = por %p115, %p116
      %p118 = scmp.ne.s32.totalorder %s110, %s113
      %p119 = scmp.eq.s32.totalorder %s16, 0
      %p120 = por %p118, %p119
      %p121 = scmp.ne.s32.totalorder %s110, %s113
      %p122 = scmp.eq.s32.totalorder %s21, 5
      %p123 = por %p121, %p122
      %p124 = scmp.ne.s32.totalorder %s113, %s114
      %p125 = scmp.eq.s32.totalorder %s21, 0
      %p126 = por %p124, %p125
      %p127 = scmp.ne.s32.totalorder %s113, %s114
      %p128 = scmp.eq.s32.totalorder %s22, 5
      %p129 = por %p127, %p128
      %p131 = scmp.ne.s32.totalorder %s114, %s130
      %p132 = scmp.eq.s32.totalorder %s22, 0
      %p133 = por %p131, %p132
      %p134 = scmp.le.s32.totalorder 1, %s16
      %p135 = scmp.lt.s32.totalorder %s16, 7
      %p136 = pnand %p134, %p135
      %p137 = pneg %p136
      // Predicated region
      $region9: #{tpu_custom_call.1} parent=5 // pred_check
        _
      $region10: #{tpu_custom_call.1} parent=5 // pred_check_branch
        %139 = sbr.rel (%p136) target = $region12
      $region11: #{tpu_custom_call.1} parent=5 // pred_region
        %s140 = ssub.s32 %s16, 1
        // Predicated region
        $region13: #{tpu_custom_call.1} parent=11 // pred_check
          %p141 = pneg %p77
        $region14: #{tpu_custom_call.1} parent=11 // pred_check_branch
          %143 = sbr.rel (%p141) target = $region16
        $region15: #{tpu_custom_call.1} parent=11 // pred_region
          %s145 = ssub.s32 640, 640
          %146 = vsyncadd [#allocation9], %s145
          %s147 = sshll.u32 [#allocation8], 4
          %s148 = int_to_ptr.vmem [resolvable:$true] %s147
          %153 = dma.hbm_to_vmem [thread:$0]  %s1, 640, %s148, [#allocation9], 128, 128, 8
        $region16: #{tpu_custom_call.1} parent=11 // pred_fallthru
          _
        // Predicated region
        $region17: #{tpu_custom_call.1} parent=11 // pred_check
          %p154 = pneg %p98
        $region18: #{tpu_custom_call.1} parent=11 // pred_check_branch
          %156 = sbr.rel (%p154) target = $region20
        $region19: #{tpu_custom_call.1} parent=11 // pred_region
          %s158 = ssub.s32 32, 32
          %159 = vsyncadd [#allocation9], %s158
          %s161 = sshll.u32 [#allocation10], 4
          %s162 = int_to_ptr.vmem [resolvable:$true] %s161
          %164 = dma.hbm_to_vmem [thread:$0]  %s2, 32, %s162, [#allocation9]
        $region20: #{tpu_custom_call.1} parent=11 // pred_fallthru
          _
      $region12: #{tpu_custom_call.1} parent=5 // pred_fallthru
        _
      %p165 = scmp.lt.s32.totalorder %s16, 6
      // Predicated region
      $region21: #{tpu_custom_call.1} parent=5 // pred_check
        %p166 = pneg %p165
      $region22: #{tpu_custom_call.1} parent=5 // pred_check_branch
        %168 = sbr.rel (%p166) target = $region24
      $region23: #{tpu_custom_call.1} parent=5 // pred_region
        // Predicated region
        $region25: #{tpu_custom_call.1} parent=23 // pred_check
          %p169 = pneg %p50
        $region26: #{tpu_custom_call.1} parent=23 // pred_check_branch
          %171 = sbr.rel (%p169) target = $region28
        $region27: #{tpu_custom_call.1} parent=23 // pred_region
          %s172 = sand.u32 %s40, 1
          %s173 = scalar_lea.sflag [#allocation6], %s172
          %s174 = sand.u32 %s40, 1
          %s175 = smul.addr %s174, 16
          %s176 = scalar_lea.vmem [#allocation5], %s175
          %s177 = smul.u32 2, %s24
          %s179 = ssub.s32 256, 256
          %180 = vsyncadd %s173, %s179
          %s181 = smul.addr %s23, 6
          %s182 = sadd.s32 %s177, %s181
          %s183 = smul.addr %s182, 128
          %s184 = scalar_lea.hbm %s0, %s183
          %s185 = sshll.u32 %s176, 4
          %s186 = int_to_ptr.vmem [resolvable:$true] %s185
          %191 = dma.hbm_to_vmem [thread:$0]  %s184, 256, %s186, %s173, 128, 128, 8
        $region28: #{tpu_custom_call.1} parent=23 // pred_fallthru
          _
      $region24: #{tpu_custom_call.1} parent=5 // pred_fallthru
        _
      %p192 = scmp.le.s32.totalorder 1, %s16
      %p193 = scmp.lt.s32.totalorder %s16, 7
      %p194 = pnand %p192, %p193
      %p195 = pneg %p194
      // Predicated region
      $region29: #{tpu_custom_call.1} parent=5 // pred_check
        _
      $region30: #{tpu_custom_call.1} parent=5 // pred_check_branch
        %197 = sbr.rel (%p194) target = $region32
      $region31: #{tpu_custom_call.1} parent=5 // pred_region
        %s198 = ssub.s32 %s16, 1
        %s199 = sand.u32 %s43, 1
        %s200 = scalar_lea.sflag [#allocation6], %s199
        %s201 = sand.u32 %s43, 1
        %s202 = smul.addr %s201, 16
        %s203 = scalar_lea.vmem [#allocation5], %s202
        // Predicated region
        $region33: #{tpu_custom_call.1} parent=31 // pred_check
          %p204 = pneg %p56
        $region34: #{tpu_custom_call.1} parent=31 // pred_check_branch
          %206 = sbr.rel (%p204) target = $region36
        $region35: #{tpu_custom_call.1} parent=31 // pred_region
          %207 = dma.done %s200, 256
        $region36: #{tpu_custom_call.1} parent=31 // pred_fallthru
          _
        // Predicated region
        $region37: #{tpu_custom_call.1} parent=31 // pred_check
          %p208 = pneg %p77
        $region38: #{tpu_custom_call.1} parent=31 // pred_check_branch
          %210 = sbr.rel (%p208) target = $region40
        $region39: #{tpu_custom_call.1} parent=31 // pred_region
          %211 = dma.done [#allocation9], 640
        $region40: #{tpu_custom_call.1} parent=31 // pred_fallthru
          _
        // Predicated region
        $region41: #{tpu_custom_call.1} parent=31 // pred_check
          %p212 = pneg %p98
        $region42: #{tpu_custom_call.1} parent=31 // pred_check_branch
          %214 = sbr.rel (%p212) target = $region44
        $region43: #{tpu_custom_call.1} parent=31 // pred_region
          %215 = dma.done [#allocation9], 32
        $region44: #{tpu_custom_call.1} parent=31 // pred_fallthru
          _
        %s216 = sand.u32 %s43, 1
        %s217 = scalar_lea.sflag [#allocation6], %s216
        %s218 = sand.u32 %s43, 1
        %s219 = smul.addr %s218, 16
        %s220 = scalar_lea.vmem [#allocation5], %s219
        %p221 = pneg %p56
        %p222 = pneg %p53
        %p223 = pneg %p77
        %p224 = pneg %p74
        %p225 = pneg %p98
        %p226 = pneg %p95
        %p227 = pneg %p126
        %p228 = pneg %p123
        %s229 = sand.u32 %s113, 1
        %s230 = scalar_lea.sflag [#allocation7], %s229
        %s231 = sand.u32 %s113, 1
        %s232 = smul.addr %s231, 16
        %s233 = scalar_lea.vmem [#allocation11], %s232
        %s234 = smul.u32 2, %s26
        %s235 = smul.u32 2, %s26
        %v237 = vld [vmem:[%s203] sm:$0xff]
        %v238 = vld [vmem:[%s203 + $0x8] sm:$0xff]
        %v239 = vpack.c.bf16 %v238, %v237
        %v240 = vld [vmem:[#allocation8] sm:$0xff]
        %v241 = vld [vmem:[#allocation8 + $0x8] sm:$0xff]
        %v242 = vld [vmem:[#allocation8 + $0x10] sm:$0xff]
        %v243 = vld [vmem:[#allocation8 + $0x18] sm:$0xff]
        %v244 = vld [vmem:[#allocation8 + $0x20] sm:$0x11]
        %v250 = vunpack.c.l.b16 %v240
        %v251 = vunpack.c.h.b16 %v240
        %v252 = vunpack.c.l.b16 %v241
        %v253 = vunpack.c.h.b16 %v241
        %v254 = vunpack.c.l.b16 %v242
        %v255 = vunpack.c.h.b16 %v242
        %v256 = vunpack.c.l.b16 %v243
        %v257 = vunpack.c.h.b16 %v243
        %v258 = vunpack.c.l.b16 %v244
        %v259 = vunpack.c.h.b16 %v244
        %v260 = vpack.c.b16 %v252, %v250
        %v261 = vpack.c.b16 %v253, %v251
        %v262 = vpack.c.b16 %v256, %v254
        %v263 = vpack.c.b16 %v257, %v255
        %v264 = vpack.c.b16 %v258, %v258
        %v265 = vpack.c.b16 %v259, %v259
        %vm270 = vcmask 277504
        %v272 = vsel %vm270, %v239, 0
        %vm274 = vcmask 1040384
        %v276 = vsel %vm274, %v264, 0
        %v279 = vsel %vm274, %v265, 0
        %281 = vmatprep.subr.bf16.mxu0 %v261
        %282 = vmatpush1.bf16.msra.mxu0 %v260
        %283 = vmatprep.subr.bf16.mxu0 %v263
        %284 = vmatpush1.bf16.msra.mxu0 %v262
        %285 = vmatprep.subr.bf16.mxu0 %v279
        %286 = vmatpush1.bf16.msra.mxu0 %v276
        %287 = vmatprep.subr.bf16.mxu0 0
        %288 = vmatpush1.bf16.msra.mxu0 0
        %289 = vmatprep.subr.bf16.mxu0 0
        %290 = vmatpush1.bf16.msra.mxu0 0
        %291 = vmatprep.subr.bf16.mxu0 0
        %292 = vmatpush1.bf16.msra.mxu0 0
        %293 = vmatprep.subr.bf16.mxu0 0
        %294 = vmatpush1.bf16.msra.mxu0 0
        %295 = vmatprep.subr.bf16.mxu0 0
        %296 = vmatpush1.bf16.msra.mxu0 0
        %297 = vmatprep.subr.bf16.mxu0 0
        %298 = vmatpush1.bf16.msra.mxu0 0
        %299 = vmatprep.subr.bf16.mxu0 0
        %300 = vmatpush1.bf16.msra.mxu0 0
        %301 = vmatprep.subr.bf16.mxu0 0
        %302 = vmatpush1.bf16.msra.mxu0 0
        %303 = vmatprep.subr.bf16.mxu0 0
        %304 = vmatpush1.bf16.msra.mxu0 0
        %305 = vmatprep.subr.bf16.mxu0 0
        %306 = vmatpush1.bf16.msra.mxu0 0
        %307 = vmatprep.subr.bf16.mxu0 0
        %308 = vmatpush1.bf16.msra.mxu0 0
        %309 = vmatprep.subr.bf16.mxu0 0
        %310 = vmatpush1.bf16.msra.mxu0 0
        %311 = vmatprep.subr.bf16.mxu0 0
        %312 = vmatpush1.bf16.msra.mxu0 0
        %313 = vmatprep.mubr.bf16.mxu0 0
        %314 = vmatmul.mubr.bf16.gmra.mrb[0].mxu0 %v272
        %v315 = vpop.f32.mrb[0].mxu0
        %v316 = vadd.f32 0.0, %v315
        %v317 = vpop.f32.mrb[0].mxu0
        %v318 = vadd.f32 0.0, %v317
        %v319 = vpop.f32.mrb[0].mxu0
        %v320 = vadd.f32 0.0, %v319
        %v321 = vpop.f32.mrb[0].mxu0
        %v322 = vadd.f32 0.0, %v321
        %323 = vdwg.mxu0
        %324 = vst [vmem:[#allocation2] sm:$0xff] %v316
        %325 = vst [vmem:[#allocation2 + $0x8] sm:$0xff] %v318
        %326 = vst [vmem:[#allocation2 + $0x10] sm:$0xff] %v320
        %327 = vst [vmem:[#allocation2 + $0x18] sm:$0xff] %v322
        %v328 = vld [vmem:[#allocation2] sm:$0xff]
        %v329 = vld [vmem:[#allocation2 + $0x10] sm:$0xff]
        %330 = vst [vmem:[#allocation3] sm:$0xff] %v328
        %331 = vst [vmem:[#allocation3 + $0x8] sm:$0xff] %v329
        %332 = vst [vmem:[#allocation3 + $0x10] sm:$0x1] 0.0
        %v333 = vld [vmem:[#allocation3 + $0x1] sm:$0xff]
        %v334 = vld [vmem:[#allocation3 + $0x9] sm:$0xff]
        %v335 = vld [vmem:[#allocation2 + $0x8] sm:$0xff]
        %v336 = vld [vmem:[#allocation2 + $0x18] sm:$0xff]
        %v337 = vadd.f32 %v333, %v335
        %v338 = vadd.f32 %v334, %v336
        %339 = vst [vmem:[#allocation3 + $0x1] sm:$0xff] %v337
        %340 = vst [vmem:[#allocation3 + $0x9] sm:$0xff] %v338
        %p341 = scmp.gt.s32.totalorder %s26, 0
        // Predicated region
        $region45: #{tpu_custom_call.1} parent=31 // pred_check
          %p342 = pneg %p341
        $region46: #{tpu_custom_call.1} parent=31 // pred_check_branch
          %344 = sbr.rel (%p342) target = $region48
        $region47: #{tpu_custom_call.1} parent=31 // pred_region
          %v345 = vld [vmem:[#allocation3] sm:$0x1]
          %v346 = vld [vmem:[#allocation4] sm:$0x1]
          %v347 = vadd.f32 %v345, %v346
          %348 = vst [vmem:[#allocation3] sm:$0x1] %v347
        $region48: #{tpu_custom_call.1} parent=31 // pred_fallthru
          _
        %v349 = vld [vmem:[#allocation3 + $0x10] sm:$0x1]
        %350 = vst [vmem:[#allocation4] sm:$0x1] %v349
        %s351 = smul.u32 %s26, 16
        %v352 = vlaneseq
        %v353 = vshrl.u32 %v352, 7
        %v354 = vadd.s32 %v353, 8
        %v355 = vstv %s351
        %v356 = vadd.s32 %v355, %v353
        %v357 = vadd.s32 %v355, %v354
        %vm358 = vcmp.ge.s32.totalorder %v356, 0
        %vm359 = vcmp.ge.s32.totalorder %v357, 0
        %vm360 = vcmp.lt.s32.totalorder %v356, 48
        %vm361 = vcmp.lt.s32.totalorder %v357, 48
        %vm362 = vmand %vm358, %vm360
        %vm363 = vmand %vm359, %vm361
        %v364 = vsel %vm362, 1, 0
        %v365 = vsel %vm363, 1, 0
        %v366 = vcvt.s32.f32 %v364
        %v367 = vcvt.s32.f32 %v365
        %v368 = vld [vmem:[#allocation10] sm:$0x1]
        %v369 = vlaneseq
        %v370 = vshrl.u32 %v369, 7
        %v371 = vsub.s32 0, %v370
        %v372 = vrot.slane %v368, %v371
        %v373 = vmul.f32 %v366, %v372
        %v374 = vmul.f32 %v367, %v372
        %v375 = vadd.f32 %v373, 0.0
        %v376 = vadd.f32 %v374, 0.0
        %vm377 = vcmp.ge.s32.totalorder %v356, 1
        %vm378 = vcmp.ge.s32.totalorder %v357, 1
        %vm379 = vcmp.lt.s32.totalorder %v356, 49
        %vm380 = vcmp.lt.s32.totalorder %v357, 49
        %vm381 = vmand %vm377, %vm379
        %vm382 = vmand %vm378, %vm380
        %v383 = vsel %vm381, 1, 0
        %v384 = vsel %vm382, 1, 0
        %v385 = vcvt.s32.f32 %v383
        %v386 = vcvt.s32.f32 %v384
        %v387 = vld [vmem:[#allocation10 + $0x1] sm:$0x1]
        %v388 = vlaneseq
        %v389 = vshrl.u32 %v388, 7
        %v390 = vsub.s32 0, %v389
        %v391 = vrot.slane %v387, %v390
        %v392 = vmul.f32 %v385, %v391
        %v393 = vmul.f32 %v386, %v391
        %v394 = vadd.f32 %v375, %v392
        %v395 = vadd.f32 %v376, %v393
        %v396 = vadd.f32 %v394, 1e-08
        %v397 = vadd.f32 %v395, 1e-08
        %v398 = vrcp.pop %v396
        %v399 = vrcp.pop %v397
        %vm400 = vcmp.gt.f32.partialorder %v394, 0.0
        %vm401 = vcmp.gt.f32.partialorder %v395, 0.0
        %v402 = vld [vmem:[#allocation3] sm:$0xff]
        %v403 = vld [vmem:[#allocation3 + $0x8] sm:$0xff]
        %v404 = vmul.f32 %v402, %v398
        %v405 = vmul.f32 %v403, %v399
        %v406 = vsel %vm400, %v404, 0.0
        %v407 = vsel %vm401, %v405, 0.0
        %vm408 = vcmask 130048
        %409 = vst.msk [vmem:[%s233] sm:$0xff] %vm408, %v406
        %410 = vst.msk [vmem:[%s233 + $0x8] sm:$0xff] %vm408, %v407
        %s411 = sand.u32 %s113, 1
        %s412 = scalar_lea.sflag [#allocation7], %s411
        %s413 = sand.u32 %s113, 1
        %s414 = smul.addr %s413, 16
        %s415 = scalar_lea.vmem [#allocation11], %s414
        // Predicated region
        $region49: #{tpu_custom_call.1} parent=31 // pred_check
          %p416 = pneg %p123
        $region50: #{tpu_custom_call.1} parent=31 // pred_check_branch
          %418 = sbr.rel (%p416) target = $region52
        $region51: #{tpu_custom_call.1} parent=31 // pred_region
          %s419 = smul.u32 2, %s26
          %s421 = ssub.s32 256, 256
          %422 = vsyncadd %s412, %s421
          %s423 = smul.addr %s25, 6
          %s424 = sadd.s32 %s419, %s423
          %s425 = smul.addr %s424, 128
          %s426 = scalar_lea.hbm %s3, %s425
          %s427 = sshll.u32 %s415, 4
          %s428 = int_to_ptr.vmem [resolvable:$true] %s427
          %433 = dma.vmem_to_hbm [thread:$0]  %s428, 256, %s426, %s412, 128, 128, 8
        $region52: #{tpu_custom_call.1} parent=31 // pred_fallthru
          _
      $region32: #{tpu_custom_call.1} parent=5 // pred_fallthru
        _
      %p434 = scmp.le.s32.totalorder 2, %s16
      // Predicated region
      $region53: #{tpu_custom_call.1} parent=5 // pred_check
        %p435 = pneg %p434
      $region54: #{tpu_custom_call.1} parent=5 // pred_check_branch
        %437 = sbr.rel (%p435) target = $region56
      $region55: #{tpu_custom_call.1} parent=5 // pred_region
        %s438 = ssub.s32 %s16, 2
        // Predicated region
        $region57: #{tpu_custom_call.1} parent=55 // pred_check
          %p439 = pneg %p129
        $region58: #{tpu_custom_call.1} parent=55 // pred_check_branch
          %441 = sbr.rel (%p439) target = $region60
        $region59: #{tpu_custom_call.1} parent=55 // pred_region
          %s442 = sand.u32 %s114, 1
          %s443 = scalar_lea.sflag [#allocation7], %s442
          %s444 = sand.u32 %s114, 1
          %s445 = smul.addr %s444, 16
          %s446 = scalar_lea.vmem [#allocation11], %s445
          %447 = dma.done %s443, 256
        $region60: #{tpu_custom_call.1} parent=55 // pred_fallthru
          _
      $region56: #{tpu_custom_call.1} parent=5 // pred_fallthru
        _
    $region6: #{tpu_custom_call.1} parent=1 // loop_footer
      %s20 = sadd.s32 1, %s16
    $region7: #{tpu_custom_call.1} parent=1 // loop_footer_branch
      %15 = sbr.rel target = $region3
    $region8: #{tpu_custom_call.1} parent=1 // loop_exit
      _
    %448 = vsyncpa [#allocation6], 1
    %s449 = scalar_lea.sflag [#allocation6], 1
    %450 = vsyncpa %s449, 1
    %451 = vsyncpa [#allocation9], 1
    %452 = vsyncpa [#allocation7], 1
    %s453 = scalar_lea.sflag [#allocation7], 1
    %454 = vsyncpa %s453, 1

</llo_original>
